<compile_context>
chip_gen: v7x
topology: tpu7x:2x2x1
jax: 0.10.0
libtpu: 0.0.40
codegen_flags: <defaults>
</compile_context>

<pallas_src>
import jax
import jax.numpy as jnp
from jax import lax
from jax.experimental import pallas as pl
from jax.experimental.pallas import tpu as pltpu


def _vmem_capacity_bytes():
    try:
        return int(pltpu.get_tpu_info().vmem_capacity_bytes)
    except Exception:
        return 64 * 1024 * 1024          # conservative (v7x per-core VMEM)


def _pick_block_rows(Ho, Wp, Wo, Cin, Cpad, in_itemsize, out_itemsize, fuse,
                     budget_bytes, requested=None):
    """Largest divisor of Ho whose per-step VMEM footprint fits the budget.

    The budget check is applied even when `requested` is given (requested acts
    as an upper cap), so a user-chosen tile can't blow past vmem_limit_bytes.
    """
    divisors = [d for d in range(1, Ho + 1) if Ho % d == 0]
    w_bytes = 9 * Cin * Cpad * in_itemsize + Cpad * 4   # weights + f32 bias

    def fits(th):
        body = 4 * (th + 1) * Wp * Cin * in_itemsize    # parity planes (+halo row)
        outb = th * Wo * Cpad * out_itemsize
        slab = th * Wo * 9 * Cin * in_itemsize if fuse else 0
        live = th * Wo * Cpad * 4                       # f32 accumulator value
        need = 2 * (body + outb) + 2 * w_bytes + slab + live
        return need <= budget_bytes

    cand = [d for d in divisors if fits(d)] or [1]
    if requested is not None:
        capped = [d for d in cand if d <= max(1, int(requested))] or [1]
        return max(capped)
    # Soft preference for tiles that keep some pipeline depth, but never fall
    # below the largest fitting divisor when divisors are scarce.
    moderate = [d for d in cand if d <= 256]
    return max(moderate) if moderate else max(cand)


def _make_kernel(TH, Wo, Cin, Cpad, fuse, has_halo):
    """Build the per-tile conv kernel (all sizes static)."""
    M = TH * Wo

    def kernel(*refs):
        # refs: body[, halo], w, b, out[, slab]
        body_ref = refs[0]
        halo_ref = refs[1] if has_halo else None
        off = 1 + int(has_halo)
        w_ref, b_ref, o_ref = refs[off], refs[off + 1], refs[off + 2]
        slab_ref = refs[off + 3] if fuse else None
        # body_ref : (4, TH(+1), Wp, Cin)  parity planes for this row block
        # halo_ref : (4, 1, Wp, Cin)       plane row r*TH + TH (only if has_halo)
        # w_ref    : (9*Cin, Cpad)         tap-major packed weights
        # b_ref    : (1, Cpad) float32
        # o_ref    : (TH, Wo, Cpad)
        # slab_ref : (TH*Wo, 9*Cin)        im2col slab (fused path only)

        def contiguous_patch(plane, dh, dw):
            # Contiguous TH-row slice of a parity plane.  Valid for dh == 0
            # always, and for dh == 1 when the body block carries the +1 row.
            row0 = 0 if has_halo else dh
            return body_ref[plane, pl.ds(row0, TH), pl.ds(dw, Wo), :]

        if fuse:
            # Assemble the (TH*Wo, 9*Cin) im2col slab in VMEM, then ONE MXU
            # matmul with K = 9*Cin (fills the 256-wide MXUs on v6e/v7x).
            for kh in range(3):
                for kw in range(3):
                    k = kh * 3 + kw
                    plane = (kh % 2) * 2 + (kw % 2)
                    dh, dw = kh // 2, kw // 2
                    lanes = pl.ds(k * Cin, Cin)
                    if dh == 0 or not has_halo:
                        slab_ref[:, lanes] = (
                            contiguous_patch(plane, dh, dw).reshape(M, Cin))
                    else:
                        # kh == 2 with a separate halo row: write the shifted
                        # body rows and the halo row straight into the slab
                        # (no jnp.concatenate copies).
                        if TH > 1:
                            top = body_ref[plane, pl.ds(1, TH - 1),
                                           pl.ds(dw, Wo), :]
                            slab_ref[pl.ds(0, (TH - 1) * Wo), lanes] = (
                                top.reshape((TH - 1) * Wo, Cin))
                        bot = halo_ref[plane, :, pl.ds(dw, Wo), :]
                        slab_ref[pl.ds((TH - 1) * Wo, Wo), lanes] = (
                            bot.reshape(Wo, Cin))
            acc = jnp.dot(slab_ref[...], w_ref[...],
                          preferred_element_type=jnp.float32)
        else:
            # Cin >= 256: nine well-shaped dots, value-chained f32 accumulator
            # (no zero-init, no read-modify-write VMEM traffic per tap).
            acc = None
            for kh in range(3):
                for kw in range(3):
                    k = kh * 3 + kw
                    plane = (kh % 2) * 2 + (kw % 2)
                    dh, dw = kh // 2, kw // 2
                    if dh == 0 or not has_halo:
                        patch = contiguous_patch(plane, dh, dw)
                    elif TH == 1:
                        patch = halo_ref[plane, :, pl.ds(dw, Wo), :]
                    else:
                        patch = jnp.concatenate(
                            [body_ref[plane, pl.ds(1, TH - 1), pl.ds(dw, Wo), :],
                             halo_ref[plane, :, pl.ds(dw, Wo), :]], axis=0)
                    part = jnp.dot(patch.reshape(M, Cin),
                                   w_ref[pl.ds(k * Cin, Cin), :],
                                   preferred_element_type=jnp.float32)
                    acc = part if acc is None else acc + part

        out = acc + b_ref[...].astype(jnp.float32)
        o_ref[...] = out.reshape(TH, Wo, Cpad).astype(o_ref.dtype)

    return kernel


def downsample_nhwc(x, weight, bias, *, compute_dtype=None, block_rows=None):
    """Channels-last core: x (N, H, W, Cin) -> (N, Ho, Wo, Cout).

    weight: (Cout, Cin, 3, 3) OIHW; bias: (Cout,).
    compute_dtype: optional matmul operand dtype.  bf16 is MXU-native on
        v5e/v6e/v7x alike; accumulation is always float32.
    block_rows: optional output-row tile cap (clamped to a divisor of Ho that
        fits the VMEM budget).
    """
    N, H, W, Cin = x.shape
    Cout = weight.shape[0]
    assert weight.shape == (Cout, Cin, 3, 3), weight.shape
    assert bias.shape == (Cout,), bias.shape

    Ho, Wo = (H + 1) // 2, (W + 1) // 2          # nn.Conv2d(3, s=2, p=1) output
    Hp, Wp = Ho + 1, Wo + 1
    Cpad = ((Cout + 127) // 128) * 128           # lane-dense output stores
    in_dtype = x.dtype
    cdt = jnp.dtype(compute_dtype) if compute_dtype is not None else jnp.dtype(in_dtype)

    # ---- layout glue (XLA side) --------------------------------------------
    # Zero-pad: 1 on top/left (the conv's padding), 1 (+1 if odd) on
    # bottom/right so every parity plane is exactly (Hp, Wp).
    xp = jnp.pad(x.astype(cdt),
                 ((0, 0), (1, 1 + (H % 2)), (1, 1 + (W % 2)), (0, 0)))
    planes = [xp[:, ph::2, pw::2, :] for ph in (0, 1) for pw in (0, 1)]
    xpar = jnp.stack(planes, axis=1)                               # (N,4,Hp,Wp,C)
    # TODO(synk): if profiling shows xpar materialising as an extra HBM pass
    # (allow_input_fusion not firing), move the parity split into the kernel
    # with strided pl.ds loads from the padded NHWC array.

    # OIHW -> (kh, kw, ci, co) -> (9*Cin, Cout), zero-padded to Cpad lanes.
    w2 = jnp.transpose(weight, (2, 3, 1, 0)).reshape(9 * Cin, Cout)
    b2 = bias.astype(jnp.float32).reshape(1, Cout)
    if Cpad != Cout:
        w2 = jnp.pad(w2, ((0, 0), (0, Cpad - Cout)))
        b2 = jnp.pad(b2, ((0, 0), (0, Cpad - Cout)))
    w2 = w2.astype(cdt)

    # Fuse the 9 taps into a single K = 9*Cin MXU call while K = Cin would
    # underfill the 256-wide MXUs; for Cin >= 256 per-tap dots are well shaped.
    fuse = Cin < 256

    vmem_cap = _vmem_capacity_bytes()
    vmem_limit = min(int(vmem_cap * 0.75), 96 * 1024 * 1024)   # ~48 MiB on v7x
    TH = _pick_block_rows(Ho, Wp, Wo, Cin, Cpad,
                          jnp.dtype(cdt).itemsize, jnp.dtype(in_dtype).itemsize,
                          fuse, int(vmem_limit * 0.6), requested=block_rows)
    R = Ho // TH
    has_halo = R > 1          # single row block -> body carries the +1 row itself

    kernel = _make_kernel(TH, Wo, Cin, Cpad, fuse, has_halo)

    body_rows = TH if has_halo else TH + 1
    in_specs = [pl.BlockSpec((None, 4, body_rows, Wp, Cin),
                             lambda n, r: (n, 0, r, 0, 0))]
    inputs = [xpar]
    if has_halo:
        in_specs.append(pl.BlockSpec((None, 4, 1, Wp, Cin),
                                     lambda n, r: (n, 0, (r + 1) * TH, 0, 0)))
        inputs.append(xpar)
    # TODO(synk): single-buffer the grid-invariant weight/bias operands
    # (pipeline_mode=pl.Buffered(1)) to reclaim 9*Cin*Cpad bytes of VMEM on
    # v7x once that knob is exercised on this JAX version.
    in_specs += [pl.BlockSpec((9 * Cin, Cpad), lambda n, r: (0, 0)),
                 pl.BlockSpec((1, Cpad), lambda n, r: (0, 0))]
    inputs += [w2, b2]

    scratch_shapes = [pltpu.VMEM((TH * Wo, 9 * Cin), cdt)] if fuse else []

    out_nhwc = pl.pallas_call(
        kernel,
        out_shape=jax.ShapeDtypeStruct((N, Ho, Wo, Cpad), in_dtype),
        grid=(N, R),
        in_specs=in_specs,
        out_specs=pl.BlockSpec((None, TH, Wo, Cpad), lambda n, r: (n, r, 0, 0)),
        scratch_shapes=scratch_shapes,
        compiler_params=pltpu.CompilerParams(
            dimension_semantics=("parallel", "parallel"),
            vmem_limit_bytes=vmem_limit,
            allow_input_fusion=[True] * len(inputs),
        ),
    )(*inputs)

    if Cpad != Cout:
        out_nhwc = out_nhwc[..., :Cout]
    return out_nhwc


def downsample(x_nchw, weight, bias, *, compute_dtype=None, block_rows=None):
    """Forward of Downsample (NCHW in/out), matching the PyTorch module.

    Channels-last pipelines should call `downsample_nhwc` directly and skip
    two full HBM relayout passes (input and output transposes).
    """
    x_nhwc = jnp.transpose(x_nchw, (0, 2, 3, 1))
    out = downsample_nhwc(x_nhwc, weight, bias,
                          compute_dtype=compute_dtype, block_rows=block_rows)
    return jnp.transpose(out, (0, 3, 1, 2))


if __name__ == "__main__":
    key = jax.random.PRNGKey(0)
    kx, kw, kb = jax.random.split(key, 3)

    N, C, H, W = 2, 4, 16, 16
    x = jax.random.normal(kx, (N, C, H, W), dtype=jnp.float32)

    # Deterministic PyTorch-style uniform(-1/sqrt(fan_in), +) init.
    fan_in = C * 3 * 3
    bound = 1.0 / (fan_in ** 0.5)
    weight = jax.random.uniform(kw, (C, C, 3, 3), jnp.float32, -bound, bound)
    bias = jax.random.uniform(kb, (C,), jnp.float32, -bound, bound)

    def conv_ref(xv, wv, bv):
        return lax.conv_general_dilated(
            xv, wv, window_strides=(2, 2), padding=((1, 1), (1, 1)),
            dimension_numbers=("NCHW", "OIHW", "NCHW")) + bv.reshape(1, -1, 1, 1)

    ref = conv_ref(x, weight, bias)

    # Fused (Cin < 256), single row block -> no halo operand.
    out = jax.block_until_ready(downsample(x, weight, bias))
    assert out.shape == (N, C, H // 2, W // 2)
    assert jnp.allclose(out, ref, rtol=1e-5, atol=1e-5)

    # Fused, multi-row-block tiling path (separate halo row, slab direct-stores).
    out_tiled = jax.block_until_ready(downsample(x, weight, bias, block_rows=2))
    assert jnp.allclose(out_tiled, ref, rtol=1e-5, atol=1e-5)

    # bf16 operands (MXU-native on v5e/v6e/v7x); accumulation stays float32.
    out_bf16 = jax.block_until_ready(
        downsample(x, weight, bias, compute_dtype=jnp.bfloat16))
    assert out_bf16.shape == out.shape
    assert float(jnp.max(jnp.abs(out_bf16 - ref))) < 0.15

    # Odd spatial dims (nn.Conv2d semantics: Ho = (H+1)//2).
    x_odd = x[:, :, :15, :15]
    ref_odd = conv_ref(x_odd, weight, bias)
    out_odd = jax.block_until_ready(downsample(x_odd, weight, bias))
    assert out_odd.shape == ref_odd.shape
    assert jnp.allclose(out_odd, ref_odd, rtol=1e-5, atol=1e-5)

    # Large-channel path: non-fused, value-chained accumulation (Cin >= 256).
    C2 = 256
    xL = jax.random.normal(kx, (1, C2, 16, 16), dtype=jnp.float32)
    wL = jax.random.uniform(kw, (C2, C2, 3, 3), jnp.float32, -0.02, 0.02)
    bL = jax.random.uniform(kb, (C2,), jnp.float32, -0.02, 0.02)
    refL = conv_ref(xL, wL, bL)
    outL = jax.block_until_ready(downsample(xL, wL, bL))
    assert outL.shape == refL.shape
    assert jnp.allclose(outL, refL, rtol=5e-3, atol=5e-3)

    print("KERNEL_OK")
</pallas_src>

<mosaic_0001>
module attributes {stable_mosaic.version = 11 : i64} {
  func.func @kernel(%arg0: i32, %arg1: i32, %arg2: memref<1x4x9x9x4xf32, #tpu.memory_space<vmem>>, %arg3: memref<36x128xf32, #tpu.memory_space<vmem>>, %arg4: memref<1x128xf32, #tpu.memory_space<vmem>>, %arg5: memref<1x8x8x128xf32, #tpu.memory_space<vmem>>, %arg6: memref<64x36xf32, #tpu.memory_space<vmem>>) attributes {dimension_semantics = [#tpu.dimension_semantics<parallel>, #tpu.dimension_semantics<parallel>], iteration_bounds = array<i64: 2, 1>, scalar_prefetch = 0 : i64, scratch_operands = 1 : i64, tpu.core_type = #tpu.core_type<tc>, window_params = [{transform_indices = @transform_0, window_bounds = array<i64: 1, 4, 9, 9, 4>}, {pipeline_mode = #tpu.pipeline_mode<synchronous>, transform_indices = @transform_1, window_bounds = array<i64: 36, 128>}, {pipeline_mode = #tpu.pipeline_mode<synchronous>, transform_indices = @transform_2, window_bounds = array<i64: 1, 128>}, {transform_indices = @transform_3, window_bounds = array<i64: 1, 8, 8, 128>}]} {
    %c0 = arith.constant 0 : index
    %c0_0 = arith.constant 0 : index
    %c0_1 = arith.constant 0 : index
    %c0_2 = arith.constant 0 : index
    %c0_3 = arith.constant 0 : index
    %0 = vector.load %arg2[%c0, %c0_0, %c0_1, %c0_2, %c0_3] : memref<1x4x9x9x4xf32, #tpu.memory_space<vmem>>, vector<1x1x8x8x4xf32>
    %1 = vector.shape_cast %0 : vector<1x1x8x8x4xf32> to vector<8x8x4xf32>
    %2 = vector.shape_cast %1 : vector<8x8x4xf32> to vector<64x4xf32>
    %c0_4 = arith.constant 0 : index
    %c0_5 = arith.constant 0 : index
    %3 = vector.load %arg6[%c0_4, %c0_5] : memref<64x36xf32, #tpu.memory_space<vmem>>, vector<64x4xf32>
    tpu.vector_store %arg6[%c0_4, %c0_5], %2 {strides = array<i32>} : memref<64x36xf32, #tpu.memory_space<vmem>>, vector<64x4xf32>,
    %c0_6 = arith.constant 0 : index
    %c1 = arith.constant 1 : index
    %c0_7 = arith.constant 0 : index
    %c0_8 = arith.constant 0 : index
    %c0_9 = arith.constant 0 : index
    %4 = vector.load %arg2[%c0_6, %c1, %c0_7, %c0_8, %c0_9] : memref<1x4x9x9x4xf32, #tpu.memory_space<vmem>>, vector<1x1x8x8x4xf32>
    %5 = vector.shape_cast %4 : vector<1x1x8x8x4xf32> to vector<8x8x4xf32>
    %6 = vector.shape_cast %5 : vector<8x8x4xf32> to vector<64x4xf32>
    %c0_10 = arith.constant 0 : index
    %c4 = arith.constant 4 : index
    %7 = vector.load %arg6[%c0_10, %c4] : memref<64x36xf32, #tpu.memory_space<vmem>>, vector<64x4xf32>
    tpu.vector_store %arg6[%c0_10, %c4], %6 {strides = array<i32>} : memref<64x36xf32, #tpu.memory_space<vmem>>, vector<64x4xf32>,
    %c0_11 = arith.constant 0 : index
    %c0_12 = arith.constant 0 : index
    %c0_13 = arith.constant 0 : index
    %c1_14 = arith.constant 1 : index
    %c0_15 = arith.constant 0 : index
    %8 = vector.load %arg2[%c0_11, %c0_12, %c0_13, %c1_14, %c0_15] : memref<1x4x9x9x4xf32, #tpu.memory_space<vmem>>, vector<1x1x8x8x4xf32>
    %9 = vector.shape_cast %8 : vector<1x1x8x8x4xf32> to vector<8x8x4xf32>
    %10 = vector.shape_cast %9 : vector<8x8x4xf32> to vector<64x4xf32>
    %c0_16 = arith.constant 0 : index
    %c8 = arith.constant 8 : index
    %11 = vector.load %arg6[%c0_16, %c8] : memref<64x36xf32, #tpu.memory_space<vmem>>, vector<64x4xf32>
    tpu.vector_store %arg6[%c0_16, %c8], %10 {strides = array<i32>} : memref<64x36xf32, #tpu.memory_space<vmem>>, vector<64x4xf32>,
    %c0_17 = arith.constant 0 : index
    %c2 = arith.constant 2 : index
    %c0_18 = arith.constant 0 : index
    %c0_19 = arith.constant 0 : index
    %c0_20 = arith.constant 0 : index
    %12 = vector.load %arg2[%c0_17, %c2, %c0_18, %c0_19, %c0_20] : memref<1x4x9x9x4xf32, #tpu.memory_space<vmem>>, vector<1x1x8x8x4xf32>
    %13 = vector.shape_cast %12 : vector<1x1x8x8x4xf32> to vector<8x8x4xf32>
    %14 = vector.shape_cast %13 : vector<8x8x4xf32> to vector<64x4xf32>
    %c0_21 = arith.constant 0 : index
    %c12 = arith.constant 12 : index
    %15 = vector.load %arg6[%c0_21, %c12] : memref<64x36xf32, #tpu.memory_space<vmem>>, vector<64x4xf32>
    tpu.vector_store %arg6[%c0_21, %c12], %14 {strides = array<i32>} : memref<64x36xf32, #tpu.memory_space<vmem>>, vector<64x4xf32>,
    %c0_22 = arith.constant 0 : index
    %c3 = arith.constant 3 : index
    %c0_23 = arith.constant 0 : index
    %c0_24 = arith.constant 0 : index
    %c0_25 = arith.constant 0 : index
    %16 = vector.load %arg2[%c0_22, %c3, %c0_23, %c0_24, %c0_25] : memref<1x4x9x9x4xf32, #tpu.memory_space<vmem>>, vector<1x1x8x8x4xf32>
    %17 = vector.shape_cast %16 : vector<1x1x8x8x4xf32> to vector<8x8x4xf32>
    %18 = vector.shape_cast %17 : vector<8x8x4xf32> to vector<64x4xf32>
    %c0_26 = arith.constant 0 : index
    %c16 = arith.constant 16 : index
    %19 = vector.load %arg6[%c0_26, %c16] : memref<64x36xf32, #tpu.memory_space<vmem>>, vector<64x4xf32>
    tpu.vector_store %arg6[%c0_26, %c16], %18 {strides = array<i32>} : memref<64x36xf32, #tpu.memory_space<vmem>>, vector<64x4xf32>,
    %c0_27 = arith.constant 0 : index
    %c2_28 = arith.constant 2 : index
    %c0_29 = arith.constant 0 : index
    %c1_30 = arith.constant 1 : index
    %c0_31 = arith.constant 0 : index
    %20 = vector.load %arg2[%c0_27, %c2_28, %c0_29, %c1_30, %c0_31] : memref<1x4x9x9x4xf32, #tpu.memory_space<vmem>>, vector<1x1x8x8x4xf32>
    %21 = vector.shape_cast %20 : vector<1x1x8x8x4xf32> to vector<8x8x4xf32>
    %22 = vector.shape_cast %21 : vector<8x8x4xf32> to vector<64x4xf32>
    %c0_32 = arith.constant 0 : index
    %c20 = arith.constant 20 : index
    %23 = vector.load %arg6[%c0_32, %c20] : memref<64x36xf32, #tpu.memory_space<vmem>>, vector<64x4xf32>
    tpu.vector_store %arg6[%c0_32, %c20], %22 {strides = array<i32>} : memref<64x36xf32, #tpu.memory_space<vmem>>, vector<64x4xf32>,
    %c0_33 = arith.constant 0 : index
    %c0_34 = arith.constant 0 : index
    %c1_35 = arith.constant 1 : index
    %c0_36 = arith.constant 0 : index
    %c0_37 = arith.constant 0 : index
    %24 = vector.load %arg2[%c0_33, %c0_34, %c1_35, %c0_36, %c0_37] : memref<1x4x9x9x4xf32, #tpu.memory_space<vmem>>, vector<1x1x8x8x4xf32>
    %25 = vector.shape_cast %24 : vector<1x1x8x8x4xf32> to vector<8x8x4xf32>
    %26 = vector.shape_cast %25 : vector<8x8x4xf32> to vector<64x4xf32>
    %c0_38 = arith.constant 0 : index
    %c24 = arith.constant 24 : index
    %27 = vector.load %arg6[%c0_38, %c24] : memref<64x36xf32, #tpu.memory_space<vmem>>, vector<64x4xf32>
    tpu.vector_store %arg6[%c0_38, %c24], %26 {strides = array<i32>} : memref<64x36xf32, #tpu.memory_space<vmem>>, vector<64x4xf32>,
    %c0_39 = arith.constant 0 : index
    %c1_40 = arith.constant 1 : index
    %c1_41 = arith.constant 1 : index
    %c0_42 = arith.constant 0 : index
    %c0_43 = arith.constant 0 : index
    %28 = vector.load %arg2[%c0_39, %c1_40, %c1_41, %c0_42, %c0_43] : memref<1x4x9x9x4xf32, #tpu.memory_space<vmem>>, vector<1x1x8x8x4xf32>
    %29 = vector.shape_cast %28 : vector<1x1x8x8x4xf32> to vector<8x8x4xf32>
    %30 = vector.shape_cast %29 : vector<8x8x4xf32> to vector<64x4xf32>
    %c0_44 = arith.constant 0 : index
    %c28 = arith.constant 28 : index
    %31 = vector.load %arg6[%c0_44, %c28] : memref<64x36xf32, #tpu.memory_space<vmem>>, vector<64x4xf32>
    tpu.vector_store %arg6[%c0_44, %c28], %30 {strides = array<i32>} : memref<64x36xf32, #tpu.memory_space<vmem>>, vector<64x4xf32>,
    %c0_45 = arith.constant 0 : index
    %c0_46 = arith.constant 0 : index
    %c1_47 = arith.constant 1 : index
    %c1_48 = arith.constant 1 : index
    %c0_49 = arith.constant 0 : index
    %32 = vector.load %arg2[%c0_45, %c0_46, %c1_47, %c1_48, %c0_49] : memref<1x4x9x9x4xf32, #tpu.memory_space<vmem>>, vector<1x1x8x8x4xf32>
    %33 = vector.shape_cast %32 : vector<1x1x8x8x4xf32> to vector<8x8x4xf32>
    %34 = vector.shape_cast %33 : vector<8x8x4xf32> to vector<64x4xf32>
    %c0_50 = arith.constant 0 : index
    %c32 = arith.constant 32 : index
    %35 = vector.load %arg6[%c0_50, %c32] : memref<64x36xf32, #tpu.memory_space<vmem>>, vector<64x4xf32>
    tpu.vector_store %arg6[%c0_50, %c32], %34 {strides = array<i32>} : memref<64x36xf32, #tpu.memory_space<vmem>>, vector<64x4xf32>,
    %c0_51 = arith.constant 0 : index
    %c0_52 = arith.constant 0 : index
    %36 = vector.load %arg6[%c0_51, %c0_52] : memref<64x36xf32, #tpu.memory_space<vmem>>, vector<64x36xf32>
    %c0_53 = arith.constant 0 : index
    %c0_54 = arith.constant 0 : index
    %37 = vector.load %arg3[%c0_53, %c0_54] : memref<36x128xf32, #tpu.memory_space<vmem>>, vector<36x128xf32>
    %cst = arith.constant dense<0.000000e+00> : vector<64x128xf32>
    %38 = tpu.matmul %36, %37, %cst {dimension_numbers = #tpu.dot_dimension_numbers<[1], [0], [0], [1], [0, 0, 1, 1], [], []>} : vector<64x36xf32>, vector<36x128xf32>, vector<64x128xf32> -> vector<64x128xf32>
    %c0_55 = arith.constant 0 : index
    %c0_56 = arith.constant 0 : index
    %39 = vector.load %arg4[%c0_55, %c0_56] : memref<1x128xf32, #tpu.memory_space<vmem>>, vector<1x128xf32>
    %40 = vector.broadcast %39 : vector<1x128xf32> to vector<64x128xf32>
    %41 = arith.addf %38, %40 : vector<64x128xf32>
    %42 = vector.shape_cast %41 : vector<64x128xf32> to vector<8x8x128xf32>
    %c0_57 = arith.constant 0 : index
    %c0_58 = arith.constant 0 : index
    %c0_59 = arith.constant 0 : index
    %c0_60 = arith.constant 0 : index
    %43 = vector.load %arg5[%c0_57, %c0_58, %c0_59, %c0_60] : memref<1x8x8x128xf32, #tpu.memory_space<vmem>>, vector<1x8x8x128xf32>
    %44 = vector.shape_cast %43 : vector<1x8x8x128xf32> to vector<8x8x128xf32>
    %45 = vector.shape_cast %42 : vector<8x8x128xf32> to vector<1x8x8x128xf32>
    tpu.vector_store %arg5[%c0_57, %c0_58, %c0_59, %c0_60], %45 {strides = array<i32>} : memref<1x8x8x128xf32, #tpu.memory_space<vmem>>, vector<1x8x8x128xf32>,
    return
  }
  func.func @transform_0(%arg0: i32, %arg1: i32) -> (i32, i32, i32, i32, i32) {
    %c0_i32 = arith.constant 0 : i32
    %c0_i32_0 = arith.constant 0 : i32
    %c0_i32_1 = arith.constant 0 : i32
    %c0_i32_2 = arith.constant 0 : i32
    return %arg0, %c0_i32, %arg1, %c0_i32_0, %c0_i32_1 : i32, i32, i32, i32, i32
  }
  func.func @transform_1(%arg0: i32, %arg1: i32) -> (i32, i32) {
    %c0_i32 = arith.constant 0 : i32
    %c0_i32_0 = arith.constant 0 : i32
    %c0_i32_1 = arith.constant 0 : i32
    return %c0_i32, %c0_i32_0 : i32, i32
  }
  func.func @transform_2(%arg0: i32, %arg1: i32) -> (i32, i32) {
    %c0_i32 = arith.constant 0 : i32
    %c0_i32_0 = arith.constant 0 : i32
    %c0_i32_1 = arith.constant 0 : i32
    return %c0_i32, %c0_i32_0 : i32, i32
  }
  func.func @transform_3(%arg0: i32, %arg1: i32) -> (i32, i32, i32, i32) {
    %c0_i32 = arith.constant 0 : i32
    %c0_i32_0 = arith.constant 0 : i32
    %c0_i32_1 = arith.constant 0 : i32
    return %arg0, %arg1, %c0_i32, %c0_i32_0 : i32, i32, i32, i32
  }
}

</mosaic_0001>

<llo_original>
// kernel: tpu_custom_call.1
$region0: #{tpu_custom_call.1}
  #allocation0 [shape = 'u32[]', space=smem, size = 0x4, offset = 0x4, fixed_abs, tag = 'smem constant byte address 0x4 - core index']
  #allocation1 [shape = 'u32[144,128]{1,0:T(1,128)}', space=vmem, size = 0x12000, scoped, tag = 'internal scratch']
  #allocation2 [shape = 'f32[64,36]{1,0:T(8,128)}', space=vmem, size = 0x8000, scoped, tag = 'scratch operand']
  %s0 = inlined_call_operand.vmem [shape: f32[2,4,9,9,4], index: 0, kind: input, shape index: {}]
  %s1 = inlined_call_operand.vmem [shape: f32[36,128], index: 1, kind: input, shape index: {}]
  %s2 = inlined_call_operand.vmem [shape: f32[1,128], index: 2, kind: input, shape index: {}]
  %s3 = inlined_call_operand.hbm [shape: f32[2,8,8,128], index: 3, kind: output, shape index: {}]
  %s4 = sld [smem:[#allocation0]]
  $region45: #{tpu_custom_call.1} parent=0
    _
  %s6 = ssub.s32 1, %s4
  %s7 = scalar_select 0, %s6, %s4
  $region1: #{tpu_custom_call.1} parent=0
    #allocation3 [shape = 'u8[65536]{0}', space=vmem, size = 0x10000, scoped, tag = 'output window, operand 0']
    #allocation4 [shape = 's32[2]{0}', space=sflag, size = 0x8, scoped, tag = 'scoped memory for tpu_custom_call.1']
    %8 = vsyncpa [#allocation4], 0
    %s9 = scalar_lea.sflag [#allocation4], 1
    %10 = vsyncpa %s9, 0
    loop: start=0, step=1, limit=4
    $region2: #{tpu_custom_call.1} parent=1 // loop_pre_header
      _
    $region3: #{tpu_custom_call.1} parent=1 // loop_header
      %s12 = sphi 0, %s16
      %p13 = scmp.ge.s32.totalorder %s12, 4
      %s19 = sphi 0, %s31
      %s20 = sphi 0, %s27
      %s21 = sphi 0, %s19
      %s22 = sphi 0, %s20
      %s23 = sphi 0, %s21
      %s24 = sphi 0, %s22
      %s36 = sphi 0, %s38
      %s39 = sphi 0, %s36
      %s40 = sphi 0, %s39
      %s56 = sphi 0, %s40
      %s60 = sphi 0, %s60
      %s62 = sphi 0, %s60
      %s63 = sphi 0, %s62
      %s77 = sphi 0, %s63
      %s81 = sphi 0, %s81
      %s83 = sphi 0, %s81
      %s84 = sphi 0, %s83
      %s98 = sphi 0, %s84
      %s106 = sphi 0, %s108
      %s109 = sphi 0, %s106
      %s110 = sphi 0, %s109
      %s126 = sphi 0, %s110
    $region4: #{tpu_custom_call.1} parent=1 // loop_header_branch
      %15 = sbr.rel (%p13) target = $region8
    $region5: #{tpu_custom_call.1} parent=1 // loop_body
      %s17 = ssub.s32 %s12, 1
      %s18 = ssub.s32 %s12, 2
      %s25 = sadd.s32 1, %s20
      %p26 = scmp.ge.s32.totalorder %s25, 1
      %s27 = scalar_select %p26, 0, %s25
      %s28 = sadd.s32 1, %s19
      %s29 = scalar_select %p26, %s28, %s19
      %p30 = scmp.ge.s32.totalorder %s29, 2
      %s31 = scalar_select %p30, 0, %s29
      %s32 = ssub.s32 %s19, %s31
      %s33 = ssub.s32 %s20, %s27
      %s34 = sor.u32 %s32, %s33
      %p35 = scmp.eq.s32.totalorder %s34, 0
      %s37 = sadd.s32 %s36, 1
      %s38 = scalar_select %p35, %s36, %s37
      %p41 = pneg %p35
      %p42 = scmp.eq.s32.totalorder %s12, 1
      %p43 = por %p41, %p42
      %p44 = scmp.ne.s32.totalorder %s36, %s39
      %p45 = scmp.eq.s32.totalorder %s12, 0
      %p46 = por %p44, %p45
      %p47 = scmp.ne.s32.totalorder %s36, %s39
      %p48 = scmp.eq.s32.totalorder %s17, 1
      %p49 = por %p47, %p48
      %p50 = scmp.ne.s32.totalorder %s39, %s40
      %p51 = scmp.eq.s32.totalorder %s17, 0
      %p52 = por %p50, %p51
      %p53 = scmp.ne.s32.totalorder %s39, %s40
      %p54 = scmp.eq.s32.totalorder %s18, 1
      %p55 = por %p53, %p54
      %p57 = scmp.ne.s32.totalorder %s40, %s56
      %p58 = scmp.eq.s32.totalorder %s18, 0
      %p59 = por %p57, %p58
      %s61 = sadd.s32 %s60, 1
      %p64 = scmp.eq.s32.totalorder %s12, 1
      %p65 = scmp.ne.s32.totalorder %s60, %s62
      %p66 = scmp.eq.s32.totalorder %s12, 0
      %p67 = por %p65, %p66
      %p68 = scmp.ne.s32.totalorder %s60, %s62
      %p69 = scmp.eq.s32.totalorder %s17, 1
      %p70 = por %p68, %p69
      %p71 = scmp.ne.s32.totalorder %s62, %s63
      %p72 = scmp.eq.s32.totalorder %s17, 0
      %p73 = por %p71, %p72
      %p74 = scmp.ne.s32.totalorder %s62, %s63
      %p75 = scmp.eq.s32.totalorder %s18, 1
      %p76 = por %p74, %p75
      %p78 = scmp.ne.s32.totalorder %s63, %s77
      %p79 = scmp.eq.s32.totalorder %s18, 0
      %p80 = por %p78, %p79
      %s82 = sadd.s32 %s81, 1
      %p85 = scmp.eq.s32.totalorder %s12, 1
      %p86 = scmp.ne.s32.totalorder %s81, %s83
      %p87 = scmp.eq.s32.totalorder %s12, 0
      %p88 = por %p86, %p87
      %p89 = scmp.ne.s32.totalorder %s81, %s83
      %p90 = scmp.eq.s32.totalorder %s17, 1
      %p91 = por %p89, %p90
      %p92 = scmp.ne.s32.totalorder %s83, %s84
      %p93 = scmp.eq.s32.totalorder %s17, 0
      %p94 = por %p92, %p93
      %p95 = scmp.ne.s32.totalorder %s83, %s84
      %p96 = scmp.eq.s32.totalorder %s18, 1
      %p97 = por %p95, %p96
      %p99 = scmp.ne.s32.totalorder %s84, %s98
      %p100 = scmp.eq.s32.totalorder %s18, 0
      %p101 = por %p99, %p100
      %s102 = ssub.s32 %s19, %s31
      %s103 = ssub.s32 %s20, %s27
      %s104 = sor.u32 %s102, %s103
      %p105 = scmp.eq.s32.totalorder %s104, 0
      %s107 = sadd.s32 %s106, 1
      %s108 = scalar_select %p105, %s106, %s107
      %p111 = pneg %p105
      %p112 = scmp.eq.s32.totalorder %s12, 1
      %p113 = por %p111, %p112
      %p114 = scmp.ne.s32.totalorder %s106, %s109
      %p115 = scmp.eq.s32.totalorder %s12, 0
      %p116 = por %p114, %p115
      %p117 = scmp.ne.s32.totalorder %s106, %s109
      %p118 = scmp.eq.s32.totalorder %s17, 1
      %p119 = por %p117, %p118
      %p120 = scmp.ne.s32.totalorder %s109, %s110
      %p121 = scmp.eq.s32.totalorder %s17, 0
      %p122 = por %p120, %p121
      %p123 = scmp.ne.s32.totalorder %s109, %s110
      %p124 = scmp.eq.s32.totalorder %s18, 1
      %p125 = por %p123, %p124
      %p127 = scmp.ne.s32.totalorder %s110, %s126
      %p128 = scmp.eq.s32.totalorder %s18, 0
      %p129 = por %p127, %p128
      %p130 = scmp.le.s32.totalorder 1, %s12
      %p131 = scmp.lt.s32.totalorder %s12, 3
      %p132 = pnand %p130, %p131
      %p133 = pneg %p132
      // Predicated region
      $region9: #{tpu_custom_call.1} parent=5 // pred_check
        _
      $region10: #{tpu_custom_call.1} parent=5 // pred_check_branch
        %135 = sbr.rel (%p132) target = $region12
      $region11: #{tpu_custom_call.1} parent=5 // pred_region
        %s136 = ssub.s32 %s12, 1
        // Predicated region
        $region13: #{tpu_custom_call.1} parent=11 // pred_check
          %p137 = pneg %p73
        $region14: #{tpu_custom_call.1} parent=11 // pred_check_branch
          %139 = sbr.rel (%p137) target = $region16
        $region15: #{tpu_custom_call.1} parent=11 // pred_region
          _
        $region16: #{tpu_custom_call.1} parent=11 // pred_fallthru
          _
        // Predicated region
        $region17: #{tpu_custom_call.1} parent=11 // pred_check
          %p140 = pneg %p94
        $region18: #{tpu_custom_call.1} parent=11 // pred_check_branch
          %142 = sbr.rel (%p140) target = $region20
        $region19: #{tpu_custom_call.1} parent=11 // pred_region
          _
        $region20: #{tpu_custom_call.1} parent=11 // pred_fallthru
          _
      $region12: #{tpu_custom_call.1} parent=5 // pred_fallthru
        _
      %p143 = scmp.lt.s32.totalorder %s12, 2
      // Predicated region
      $region21: #{tpu_custom_call.1} parent=5 // pred_check
        %p144 = pneg %p143
      $region22: #{tpu_custom_call.1} parent=5 // pred_check_branch
        %146 = sbr.rel (%p144) target = $region24
      $region23: #{tpu_custom_call.1} parent=5 // pred_region
        // Predicated region
        $region25: #{tpu_custom_call.1} parent=23 // pred_check
          %p147 = pneg %p46
        $region26: #{tpu_custom_call.1} parent=23 // pred_check_branch
          %149 = sbr.rel (%p147) target = $region28
        $region27: #{tpu_custom_call.1} parent=23 // pred_region
          %s150 = smul.u32 9, %s20
          %p151 = scmp.lt.s32.totalorder %s19, 1
          %s152 = scalar_select %p151, %s19, 1
          %p153 = scmp.lt.s32.totalorder %s150, 8
          %s154 = scalar_select %p153, %s150, 8
          %s155 = smul.addr %s154, 2
          %s156 = smul.addr %s152, 72
          %s157 = sadd.s32 %s155, %s156
          %s158 = smul.addr %s157, 8
          %s159 = scalar_lea.vmem %s0, %s158
          %s160 = smul.u32 9, %s20
        $region28: #{tpu_custom_call.1} parent=23 // pred_fallthru
          _
      $region24: #{tpu_custom_call.1} parent=5 // pred_fallthru
        _
      %p161 = scmp.le.s32.totalorder 1, %s12
      %p162 = scmp.lt.s32.totalorder %s12, 3
      %p163 = pnand %p161, %p162
      %p164 = pneg %p163
      // Predicated region
      $region29: #{tpu_custom_call.1} parent=5 // pred_check
        _
      $region30: #{tpu_custom_call.1} parent=5 // pred_check_branch
        %166 = sbr.rel (%p163) target = $region32
      $region31: #{tpu_custom_call.1} parent=5 // pred_region
        %s167 = ssub.s32 %s12, 1
        %s168 = smul.u32 9, %s22
        %p169 = scmp.lt.s32.totalorder %s21, 1
        %s170 = scalar_select %p169, %s21, 1
        %p171 = scmp.lt.s32.totalorder %s168, 8
        %s172 = scalar_select %p171, %s168, 8
        %s173 = smul.addr %s172, 2
        %s174 = smul.addr %s170, 72
        %s175 = sadd.s32 %s173, %s174
        %s176 = smul.addr %s175, 8
        %s177 = scalar_lea.vmem %s0, %s176
        %p178 = pneg %p52
        %p179 = pneg %p49
        %p180 = pneg %p73
        %p181 = pneg %p70
        %p182 = pneg %p94
        %p183 = pneg %p91
        %p184 = pneg %p122
        %p185 = pneg %p119
        %s186 = sand.u32 %s109, 1
        %s187 = scalar_lea.sflag [#allocation4], %s186
        %s188 = sand.u32 %s109, 1
        %s189 = smul.addr %s188, 64
        %s190 = scalar_lea.vmem [#allocation3], %s189
        %s191 = smul.u32 9, %s22
        %p192 = scmp.lt.s32.totalorder %s21, 1
        %s193 = scalar_select %p192, %s21, 1
        %p194 = scmp.lt.s32.totalorder %s191, 8
        %s195 = scalar_select %p194, %s191, 8
        %s196 = smul.addr %s195, 2
        %s197 = smul.addr %s193, 72
        %s198 = sadd.s32 %s196, %s197
        %s199 = smul.addr %s198, 8
        %s200 = scalar_lea.vmem %s0, %s199
        %s201 = smul.u32 9, %s22
        %s202 = smul.u32 8, %s22
        %v203 = vld [vmem:[%s200] sm:$0xff]
        %v204 = vld [vmem:[%s200 + $0x10] sm:$0xff]
        %v205 = vld [vmem:[%s200 + $0x20] sm:$0xff]
        %v206 = vld [vmem:[%s200 + $0x30] sm:$0xff]
        %v207 = vld [vmem:[%s200 + $0x40] sm:$0xff]
        %v208 = vld [vmem:[%s200 + $0x50] sm:$0xff]
        %v209 = vld [vmem:[%s200 + $0x60] sm:$0xff]
        %v210 = vld [vmem:[%s200 + $0x70] sm:$0xff]
        %vm211 = vcmask 31744
        %212 = vst.msk [vmem:[#allocation2] sm:$0xff] %vm211, %v203
        %213 = vst.msk [vmem:[#allocation2 + $0x8] sm:$0xff] %vm211, %v204
        %214 = vst.msk [vmem:[#allocation2 + $0x10] sm:$0xff] %vm211, %v205
        %215 = vst.msk [vmem:[#allocation2 + $0x18] sm:$0xff] %vm211, %v206
        %216 = vst.msk [vmem:[#allocation2 + $0x20] sm:$0xff] %vm211, %v207
        %217 = vst.msk [vmem:[#allocation2 + $0x28] sm:$0xff] %vm211, %v208
        %218 = vst.msk [vmem:[#allocation2 + $0x30] sm:$0xff] %vm211, %v209
        %219 = vst.msk [vmem:[#allocation2 + $0x38] sm:$0xff] %vm211, %v210
        %s220 = scalar_lea.vmem %s200, 144
        %v221 = vld [vmem:[%s220] sm:$0xff]
        %v222 = vld [vmem:[%s220 + $0x10] sm:$0xff]
        %v223 = vld [vmem:[%s220 + $0x20] sm:$0xff]
        %v224 = vld [vmem:[%s220 + $0x30] sm:$0xff]
        %v225 = vld [vmem:[%s220 + $0x40] sm:$0xff]
        %v226 = vld [vmem:[%s220 + $0x50] sm:$0xff]
        %v227 = vld [vmem:[%s220 + $0x60] sm:$0xff]
        %v228 = vld [vmem:[%s220 + $0x70] sm:$0xff]
        %237 = vrot.lane.b32.xlu0 %v221, 4
        %v238 = vpop.permute.xlu0 %237
        %239 = vrot.lane.b32.xlu0 %v222, 4
        %v240 = vpop.permute.xlu0 %239
        %241 = vrot.lane.b32.xlu0 %v223, 4
        %v242 = vpop.permute.xlu0 %241
        %243 = vrot.lane.b32.xlu0 %v224, 4
        %v244 = vpop.permute.xlu0 %243
        %245 = vrot.lane.b32.xlu0 %v225, 4
        %v246 = vpop.permute.xlu0 %245
        %247 = vrot.lane.b32.xlu0 %v226, 4
        %v248 = vpop.permute.xlu0 %247
        %249 = vrot.lane.b32.xlu0 %v227, 4
        %v250 = vpop.permute.xlu0 %249
        %251 = vrot.lane.b32.xlu0 %v228, 4
        %v252 = vpop.permute.xlu0 %251
        %vm261 = vcmask 64544
        %262 = vst.msk [vmem:[#allocation2] sm:$0xff] %vm261, %v238
        %263 = vst.msk [vmem:[#allocation2 + $0x8] sm:$0xff] %vm261, %v240
        %264 = vst.msk [vmem:[#allocation2 + $0x10] sm:$0xff] %vm261, %v242
        %265 = vst.msk [vmem:[#allocation2 + $0x18] sm:$0xff] %vm261, %v244
        %266 = vst.msk [vmem:[#allocation2 + $0x20] sm:$0xff] %vm261, %v246
        %267 = vst.msk [vmem:[#allocation2 + $0x28] sm:$0xff] %vm261, %v248
        %268 = vst.msk [vmem:[#allocation2 + $0x30] sm:$0xff] %vm261, %v250
        %269 = vst.msk [vmem:[#allocation2 + $0x38] sm:$0xff] %vm261, %v252
        %v270 = vld [vmem:[%s200 + $0x1] sm:$0xff]
        %v271 = vld [vmem:[%s200 + $0x11] sm:$0xff]
        %v272 = vld [vmem:[%s200 + $0x21] sm:$0xff]
        %v273 = vld [vmem:[%s200 + $0x31] sm:$0xff]
        %v274 = vld [vmem:[%s200 + $0x41] sm:$0xff]
        %v275 = vld [vmem:[%s200 + $0x51] sm:$0xff]
        %v276 = vld [vmem:[%s200 + $0x61] sm:$0xff]
        %v277 = vld [vmem:[%s200 + $0x71] sm:$0xff]
        %286 = vrot.lane.b32.xlu0 %v270, 8
        %v287 = vpop.permute.xlu0 %286
        %288 = vrot.lane.b32.xlu0 %v271, 8
        %v289 = vpop.permute.xlu0 %288
        %290 = vrot.lane.b32.xlu0 %v272, 8
        %v291 = vpop.permute.xlu0 %290
        %292 = vrot.lane.b32.xlu0 %v273, 8
        %v293 = vpop.permute.xlu0 %292
        %294 = vrot.lane.b32.xlu0 %v274, 8
        %v295 = vpop.permute.xlu0 %294
        %296 = vrot.lane.b32.xlu0 %v275, 8
        %v297 = vpop.permute.xlu0 %296
        %298 = vrot.lane.b32.xlu0 %v276, 8
        %v299 = vpop.permute.xlu0 %298
        %300 = vrot.lane.b32.xlu0 %v277, 8
        %v301 = vpop.permute.xlu0 %300
        %vm310 = vcmask 97344
        %311 = vst.msk [vmem:[#allocation2] sm:$0xff] %vm310, %v287
        %312 = vst.msk [vmem:[#allocation2 + $0x8] sm:$0xff] %vm310, %v289
        %313 = vst.msk [vmem:[#allocation2 + $0x10] sm:$0xff] %vm310, %v291
        %314 = vst.msk [vmem:[#allocation2 + $0x18] sm:$0xff] %vm310, %v293
        %315 = vst.msk [vmem:[#allocation2 + $0x20] sm:$0xff] %vm310, %v295
        %316 = vst.msk [vmem:[#allocation2 + $0x28] sm:$0xff] %vm310, %v297
        %317 = vst.msk [vmem:[#allocation2 + $0x30] sm:$0xff] %vm310, %v299
        %318 = vst.msk [vmem:[#allocation2 + $0x38] sm:$0xff] %vm310, %v301
        %s319 = scalar_lea.vmem %s200, 288
        %v320 = vld [vmem:[%s319] sm:$0xff]
        %v321 = vld [vmem:[%s319 + $0x10] sm:$0xff]
        %v322 = vld [vmem:[%s319 + $0x20] sm:$0xff]
        %v323 = vld [vmem:[%s319 + $0x30] sm:$0xff]
        %v324 = vld [vmem:[%s319 + $0x40] sm:$0xff]
        %v325 = vld [vmem:[%s319 + $0x50] sm:$0xff]
        %v326 = vld [vmem:[%s319 + $0x60] sm:$0xff]
        %v327 = vld [vmem:[%s319 + $0x70] sm:$0xff]
        %336 = vrot.lane.b32.xlu0 %v320, 12
        %v337 = vpop.permute.xlu0 %336
        %338 = vrot.lane.b32.xlu0 %v321, 12
        %v339 = vpop.permute.xlu0 %338
        %340 = vrot.lane.b32.xlu0 %v322, 12
        %v341 = vpop.permute.xlu0 %340
        %342 = vrot.lane.b32.xlu0 %v323, 12
        %v343 = vpop.permute.xlu0 %342
        %344 = vrot.lane.b32.xlu0 %v324, 12
        %v345 = vpop.permute.xlu0 %344
        %346 = vrot.lane.b32.xlu0 %v325, 12
        %v347 = vpop.permute.xlu0 %346
        %348 = vrot.lane.b32.xlu0 %v326, 12
        %v349 = vpop.permute.xlu0 %348
        %350 = vrot.lane.b32.xlu0 %v327, 12
        %v351 = vpop.permute.xlu0 %350
        %vm360 = vcmask 130144
        %361 = vst.msk [vmem:[#allocation2] sm:$0xff] %vm360, %v337
        %362 = vst.msk [vmem:[#allocation2 + $0x8] sm:$0xff] %vm360, %v339
        %363 = vst.msk [vmem:[#allocation2 + $0x10] sm:$0xff] %vm360, %v341
        %364 = vst.msk [vmem:[#allocation2 + $0x18] sm:$0xff] %vm360, %v343
        %365 = vst.msk [vmem:[#allocation2 + $0x20] sm:$0xff] %vm360, %v345
        %366 = vst.msk [vmem:[#allocation2 + $0x28] sm:$0xff] %vm360, %v347
        %367 = vst.msk [vmem:[#allocation2 + $0x30] sm:$0xff] %vm360, %v349
        %368 = vst.msk [vmem:[#allocation2 + $0x38] sm:$0xff] %vm360, %v351
        %s369 = scalar_lea.vmem %s200, 432
        %v370 = vld [vmem:[%s369] sm:$0xff]
        %v371 = vld [vmem:[%s369 + $0x10] sm:$0xff]
        %v372 = vld [vmem:[%s369 + $0x20] sm:$0xff]
        %v373 = vld [vmem:[%s369 + $0x30] sm:$0xff]
        %v374 = vld [vmem:[%s369 + $0x40] sm:$0xff]
        %v375 = vld [vmem:[%s369 + $0x50] sm:$0xff]
        %v376 = vld [vmem:[%s369 + $0x60] sm:$0xff]
        %v377 = vld [vmem:[%s369 + $0x70] sm:$0xff]
        %386 = vrot.lane.b32.xlu0 %v370, 16
        %v387 = vpop.permute.xlu0 %386
        %388 = vrot.lane.b32.xlu0 %v371, 16
        %v389 = vpop.permute.xlu0 %388
        %390 = vrot.lane.b32.xlu0 %v372, 16
        %v391 = vpop.permute.xlu0 %390
        %392 = vrot.lane.b32.xlu0 %v373, 16
        %v393 = vpop.permute.xlu0 %392
        %394 = vrot.lane.b32.xlu0 %v374, 16
        %v395 = vpop.permute.xlu0 %394
        %396 = vrot.lane.b32.xlu0 %v375, 16
        %v397 = vpop.permute.xlu0 %396
        %398 = vrot.lane.b32.xlu0 %v376, 16
        %v399 = vpop.permute.xlu0 %398
        %400 = vrot.lane.b32.xlu0 %v377, 16
        %v401 = vpop.permute.xlu0 %400
        %vm410 = vcmask 162944
        %411 = vst.msk [vmem:[#allocation2] sm:$0xff] %vm410, %v387
        %412 = vst.msk [vmem:[#allocation2 + $0x8] sm:$0xff] %vm410, %v389
        %413 = vst.msk [vmem:[#allocation2 + $0x10] sm:$0xff] %vm410, %v391
        %414 = vst.msk [vmem:[#allocation2 + $0x18] sm:$0xff] %vm410, %v393
        %415 = vst.msk [vmem:[#allocation2 + $0x20] sm:$0xff] %vm410, %v395
        %416 = vst.msk [vmem:[#allocation2 + $0x28] sm:$0xff] %vm410, %v397
        %417 = vst.msk [vmem:[#allocation2 + $0x30] sm:$0xff] %vm410, %v399
        %418 = vst.msk [vmem:[#allocation2 + $0x38] sm:$0xff] %vm410, %v401
        %v419 = vld [vmem:[%s319 + $0x1] sm:$0xff]
        %v420 = vld [vmem:[%s319 + $0x11] sm:$0xff]
        %v421 = vld [vmem:[%s319 + $0x21] sm:$0xff]
        %v422 = vld [vmem:[%s319 + $0x31] sm:$0xff]
        %v423 = vld [vmem:[%s319 + $0x41] sm:$0xff]
        %v424 = vld [vmem:[%s319 + $0x51] sm:$0xff]
        %v425 = vld [vmem:[%s319 + $0x61] sm:$0xff]
        %v426 = vld [vmem:[%s319 + $0x71] sm:$0xff]
        %435 = vrot.lane.b32.xlu0 %v419, 20
        %v436 = vpop.permute.xlu0 %435
        %437 = vrot.lane.b32.xlu0 %v420, 20
        %v438 = vpop.permute.xlu0 %437
        %439 = vrot.lane.b32.xlu0 %v421, 20
        %v440 = vpop.permute.xlu0 %439
        %441 = vrot.lane.b32.xlu0 %v422, 20
        %v442 = vpop.permute.xlu0 %441
        %443 = vrot.lane.b32.xlu0 %v423, 20
        %v444 = vpop.permute.xlu0 %443
        %445 = vrot.lane.b32.xlu0 %v424, 20
        %v446 = vpop.permute.xlu0 %445
        %447 = vrot.lane.b32.xlu0 %v425, 20
        %v448 = vpop.permute.xlu0 %447
        %449 = vrot.lane.b32.xlu0 %v426, 20
        %v450 = vpop.permute.xlu0 %449
        %vm459 = vcmask 195744
        %460 = vst.msk [vmem:[#allocation2] sm:$0xff] %vm459, %v436
        %461 = vst.msk [vmem:[#allocation2 + $0x8] sm:$0xff] %vm459, %v438
        %462 = vst.msk [vmem:[#allocation2 + $0x10] sm:$0xff] %vm459, %v440
        %463 = vst.msk [vmem:[#allocation2 + $0x18] sm:$0xff] %vm459, %v442
        %464 = vst.msk [vmem:[#allocation2 + $0x20] sm:$0xff] %vm459, %v444
        %465 = vst.msk [vmem:[#allocation2 + $0x28] sm:$0xff] %vm459, %v446
        %466 = vst.msk [vmem:[#allocation2 + $0x30] sm:$0xff] %vm459, %v448
        %467 = vst.msk [vmem:[#allocation2 + $0x38] sm:$0xff] %vm459, %v450
        %s468 = scalar_lea.vmem %s200, 16
        %v469 = vld [vmem:[%s468] sm:$0xff]
        %v470 = vld [vmem:[%s468 + $0x10] sm:$0xff]
        %v471 = vld [vmem:[%s468 + $0x20] sm:$0xff]
        %v472 = vld [vmem:[%s468 + $0x30] sm:$0xff]
        %v473 = vld [vmem:[%s468 + $0x40] sm:$0xff]
        %v474 = vld [vmem:[%s468 + $0x50] sm:$0xff]
        %v475 = vld [vmem:[%s468 + $0x60] sm:$0xff]
        %v476 = vld [vmem:[%s468 + $0x70] sm:$0xff]
        %485 = vrot.lane.b32.xlu0 %v469, 24
        %v486 = vpop.permute.xlu0 %485
        %487 = vrot.lane.b32.xlu0 %v470, 24
        %v488 = vpop.permute.xlu0 %487
        %489 = vrot.lane.b32.xlu0 %v471, 24
        %v490 = vpop.permute.xlu0 %489
        %491 = vrot.lane.b32.xlu0 %v472, 24
        %v492 = vpop.permute.xlu0 %491
        %493 = vrot.lane.b32.xlu0 %v473, 24
        %v494 = vpop.permute.xlu0 %493
        %495 = vrot.lane.b32.xlu0 %v474, 24
        %v496 = vpop.permute.xlu0 %495
        %497 = vrot.lane.b32.xlu0 %v475, 24
        %v498 = vpop.permute.xlu0 %497
        %499 = vrot.lane.b32.xlu0 %v476, 24
        %v500 = vpop.permute.xlu0 %499
        %vm509 = vcmask 228544
        %510 = vst.msk [vmem:[#allocation2] sm:$0xff] %vm509, %v486
        %511 = vst.msk [vmem:[#allocation2 + $0x8] sm:$0xff] %vm509, %v488
        %512 = vst.msk [vmem:[#allocation2 + $0x10] sm:$0xff] %vm509, %v490
        %513 = vst.msk [vmem:[#allocation2 + $0x18] sm:$0xff] %vm509, %v492
        %514 = vst.msk [vmem:[#allocation2 + $0x20] sm:$0xff] %vm509, %v494
        %515 = vst.msk [vmem:[#allocation2 + $0x28] sm:$0xff] %vm509, %v496
        %516 = vst.msk [vmem:[#allocation2 + $0x30] sm:$0xff] %vm509, %v498
        %517 = vst.msk [vmem:[#allocation2 + $0x38] sm:$0xff] %vm509, %v500
        %s518 = scalar_lea.vmem %s200, 160
        %v519 = vld [vmem:[%s518] sm:$0xff]
        %v520 = vld [vmem:[%s518 + $0x10] sm:$0xff]
        %v521 = vld [vmem:[%s518 + $0x20] sm:$0xff]
        %v522 = vld [vmem:[%s518 + $0x30] sm:$0xff]
        %v523 = vld [vmem:[%s518 + $0x40] sm:$0xff]
        %v524 = vld [vmem:[%s518 + $0x50] sm:$0xff]
        %v525 = vld [vmem:[%s518 + $0x60] sm:$0xff]
        %v526 = vld [vmem:[%s518 + $0x70] sm:$0xff]
        %535 = vrot.lane.b32.xlu0 %v519, 28
        %v536 = vpop.permute.xlu0 %535
        %537 = vrot.lane.b32.xlu0 %v520, 28
        %v538 = vpop.permute.xlu0 %537
        %539 = vrot.lane.b32.xlu0 %v521, 28
        %v540 = vpop.permute.xlu0 %539
        %541 = vrot.lane.b32.xlu0 %v522, 28
        %v542 = vpop.permute.xlu0 %541
        %543 = vrot.lane.b32.xlu0 %v523, 28
        %v544 = vpop.permute.xlu0 %543
        %545 = vrot.lane.b32.xlu0 %v524, 28
        %v546 = vpop.permute.xlu0 %545
        %547 = vrot.lane.b32.xlu0 %v525, 28
        %v548 = vpop.permute.xlu0 %547
        %549 = vrot.lane.b32.xlu0 %v526, 28
        %v550 = vpop.permute.xlu0 %549
        %vm559 = vcmask 261344
        %560 = vst.msk [vmem:[#allocation2] sm:$0xff] %vm559, %v536
        %561 = vst.msk [vmem:[#allocation2 + $0x8] sm:$0xff] %vm559, %v538
        %562 = vst.msk [vmem:[#allocation2 + $0x10] sm:$0xff] %vm559, %v540
        %563 = vst.msk [vmem:[#allocation2 + $0x18] sm:$0xff] %vm559, %v542
        %564 = vst.msk [vmem:[#allocation2 + $0x20] sm:$0xff] %vm559, %v544
        %565 = vst.msk [vmem:[#allocation2 + $0x28] sm:$0xff] %vm559, %v546
        %566 = vst.msk [vmem:[#allocation2 + $0x30] sm:$0xff] %vm559, %v548
        %567 = vst.msk [vmem:[#allocation2 + $0x38] sm:$0xff] %vm559, %v550
        %v568 = vld [vmem:[%s468 + $0x1] sm:$0xff]
        %v569 = vld [vmem:[%s468 + $0x11] sm:$0xff]
        %v570 = vld [vmem:[%s468 + $0x21] sm:$0xff]
        %v571 = vld [vmem:[%s468 + $0x31] sm:$0xff]
        %v572 = vld [vmem:[%s468 + $0x41] sm:$0xff]
        %v573 = vld [vmem:[%s468 + $0x51] sm:$0xff]
        %v574 = vld [vmem:[%s468 + $0x61] sm:$0xff]
        %v575 = vld [vmem:[%s468 + $0x71] sm:$0xff]
        %584 = vrot.lane.b32.xlu0 %v568, 32
        %v585 = vpop.permute.xlu0 %584
        %586 = vrot.lane.b32.xlu0 %v569, 32
        %v587 = vpop.permute.xlu0 %586
        %588 = vrot.lane.b32.xlu0 %v570, 32
        %v589 = vpop.permute.xlu0 %588
        %590 = vrot.lane.b32.xlu0 %v571, 32
        %v591 = vpop.permute.xlu0 %590
        %592 = vrot.lane.b32.xlu0 %v572, 32
        %v593 = vpop.permute.xlu0 %592
        %594 = vrot.lane.b32.xlu0 %v573, 32
        %v595 = vpop.permute.xlu0 %594
        %596 = vrot.lane.b32.xlu0 %v574, 32
        %v597 = vpop.permute.xlu0 %596
        %598 = vrot.lane.b32.xlu0 %v575, 32
        %v599 = vpop.permute.xlu0 %598
        %vm608 = vcmask 294144
        %609 = vst.msk [vmem:[#allocation2] sm:$0xff] %vm608, %v585
        %610 = vst.msk [vmem:[#allocation2 + $0x8] sm:$0xff] %vm608, %v587
        %611 = vst.msk [vmem:[#allocation2 + $0x10] sm:$0xff] %vm608, %v589
        %612 = vst.msk [vmem:[#allocation2 + $0x18] sm:$0xff] %vm608, %v591
        %613 = vst.msk [vmem:[#allocation2 + $0x20] sm:$0xff] %vm608, %v593
        %614 = vst.msk [vmem:[#allocation2 + $0x28] sm:$0xff] %vm608, %v595
        %615 = vst.msk [vmem:[#allocation2 + $0x30] sm:$0xff] %vm608, %v597
        %616 = vst.msk [vmem:[#allocation2 + $0x38] sm:$0xff] %vm608, %v599
        %v617 = vld [vmem:[#allocation2] sm:$0xff]
        %v618 = vld [vmem:[#allocation2 + $0x8] sm:$0xff]
        %v619 = vld [vmem:[#allocation2 + $0x10] sm:$0xff]
        %v620 = vld [vmem:[#allocation2 + $0x18] sm:$0xff]
        %v621 = vld [vmem:[#allocation2 + $0x20] sm:$0xff]
        %v622 = vld [vmem:[#allocation2 + $0x28] sm:$0xff]
        %v623 = vld [vmem:[#allocation2 + $0x30] sm:$0xff]
        %v624 = vld [vmem:[#allocation2 + $0x38] sm:$0xff]
        %v625 = vld [vmem:[%s1] sm:$0xff]
        %v626 = vld [vmem:[%s1 + $0x8] sm:$0xff]
        %v627 = vld [vmem:[%s1 + $0x10] sm:$0xff]
        %v628 = vld [vmem:[%s1 + $0x18] sm:$0xff]
        %v629 = vld [vmem:[%s1 + $0x20] sm:$0xf]
        %v630 = vld [vmem:[%s2] sm:$0x1]
        %v632 = vlaneseq
        %v633 = vshrl.u32 %v632, 7
        %v634 = vsub.s32 0, %v633
        %v635 = vrot.slane %v630, %v634
        %vm637 = vcmask 293888
        %v639 = vsel %vm637, %v617, 0
        %v642 = vsel %vm637, %v618, 0
        %v645 = vsel %vm637, %v619, 0
        %v648 = vsel %vm637, %v620, 0
        %v651 = vsel %vm637, %v621, 0
        %v654 = vsel %vm637, %v622, 0
        %v657 = vsel %vm637, %v623, 0
        %v660 = vsel %vm637, %v624, 0
        %vm662 = vcmask 1043456
        %v664 = vsel %vm662, %v629, 0
        %666 = vmatprep.subr.mxu0 0.0
        %667 = vmatpush1.msra.mxu0 %v625
        %668 = vmatprep.subr.mxu0 0.0
        %669 = vmatpush1.msra.mxu0 %v626
        %670 = vmatprep.subr.mxu0 0.0
        %671 = vmatpush1.msra.mxu0 %v627
        %672 = vmatprep.subr.mxu0 0.0
        %673 = vmatpush1.msra.mxu0 %v628
        %674 = vmatprep.subr.mxu0 0.0
        %675 = vmatpush1.msra.mxu0 %v664
        %676 = vmatprep.subr.mxu0 0.0
        %677 = vmatpush1.msra.mxu0 0.0
        %678 = vmatprep.subr.mxu0 0.0
        %679 = vmatpush1.msra.mxu0 0.0
        %680 = vmatprep.subr.mxu0 0.0
        %681 = vmatpush1.msra.mxu0 0.0
        %682 = vmatprep.subr.mxu0 0.0
        %683 = vmatpush1.msra.mxu0 0.0
        %684 = vmatprep.subr.mxu0 0.0
        %685 = vmatpush1.msra.mxu0 0.0
        %686 = vmatprep.subr.mxu0 0.0
        %687 = vmatpush1.msra.mxu0 0.0
        %688 = vmatprep.subr.mxu0 0.0
        %689 = vmatpush1.msra.mxu0 0.0
        %690 = vmatprep.subr.mxu0 0.0
        %691 = vmatpush1.msra.mxu0 0.0
        %692 = vmatprep.subr.mxu0 0.0
        %693 = vmatpush1.msra.mxu0 0.0
        %694 = vmatprep.subr.mxu0 0.0
        %695 = vmatpush1.msra.mxu0 0.0
        %696 = vmatprep.subr.mxu0 0.0
        %697 = vmatpush1.msra.mxu0 0.0
        %698 = vmatprep.subr.mxu0 0.0
        %699 = vmatpush1.msra.mxu0 0.0
        %700 = vmatprep.subr.mxu0 0.0
        %701 = vmatpush1.msra.mxu0 0.0
        %702 = vmatprep.subr.mxu0 0.0
        %703 = vmatpush1.msra.mxu0 0.0
        %704 = vmatprep.subr.mxu0 0.0
        %705 = vmatpush1.msra.mxu0 0.0
        %706 = vmatprep.subr.mxu0 0.0
        %707 = vmatpush1.msra.mxu0 0.0
        %708 = vmatprep.subr.mxu0 0.0
        %709 = vmatpush1.msra.mxu0 0.0
        %710 = vmatprep.subr.mxu0 0.0
        %711 = vmatpush1.msra.mxu0 0.0
        %712 = vmatprep.subr.mxu0 0.0
        %713 = vmatpush1.msra.mxu0 0.0
        %714 = vmatprep.subr.mxu0 0.0
        %715 = vmatpush1.msra.mxu0 0.0
        %716 = vmatprep.subr.mxu0 0.0
        %717 = vmatpush1.msra.mxu0 0.0
        %718 = vmatprep.subr.mxu0 0.0
        %719 = vmatpush1.msra.mxu0 0.0
        %720 = vmatprep.subr.mxu0 0.0
        %721 = vmatpush1.msra.mxu0 0.0
        %722 = vmatprep.subr.mxu0 0.0
        %723 = vmatpush1.msra.mxu0 0.0
        %724 = vmatprep.subr.mxu0 0.0
        %725 = vmatpush1.msra.mxu0 0.0
        %726 = vmatprep.subr.mxu0 0.0
        %727 = vmatpush1.msra.mxu0 0.0
        %728 = vmatprep.subr.mxu0 0.0
        %729 = vmatpush1.msra.mxu0 0.0
        %730 = vmatprep.mubr.f32.mxu0 0.0
        %731 = vmatmul.mubr.f32.gmra.mrb[0].mxu0 %v639
        %v732 = vpop.f32.mrb[0].mxu0
        %v733 = vadd.f32 %v635, %v732
        %v734 = vpop.f32.mrb[0].mxu0
        %735 = vmatprep.mubr.f32.mxu0 0.0
        %736 = vmatmul.mubr.f32.gmra.mrb[0].mxu0 %v642
        %v737 = vpop.f32.mrb[0].mxu0
        %v738 = vadd.f32 %v635, %v737
        %v739 = vpop.f32.mrb[0].mxu0
        %740 = vmatprep.mubr.f32.mxu0 0.0
        %741 = vmatmul.mubr.f32.gmra.mrb[0].mxu0 %v645
        %v742 = vpop.f32.mrb[0].mxu0
        %v743 = vadd.f32 %v635, %v742
        %v744 = vpop.f32.mrb[0].mxu0
        %745 = vmatprep.mubr.f32.mxu0 0.0
        %746 = vmatmul.mubr.f32.gmra.mrb[0].mxu0 %v648
        %v747 = vpop.f32.mrb[0].mxu0
        %v748 = vadd.f32 %v635, %v747
        %v749 = vpop.f32.mrb[0].mxu0
        %750 = vmatprep.mubr.f32.mxu0 0.0
        %751 = vmatmul.mubr.f32.gmra.mrb[0].mxu0 %v651
        %v752 = vpop.f32.mrb[0].mxu0
        %v753 = vadd.f32 %v635, %v752
        %v754 = vpop.f32.mrb[0].mxu0
        %755 = vmatprep.mubr.f32.mxu0 0.0
        %756 = vmatmul.mubr.f32.gmra.mrb[0].mxu0 %v654
        %v757 = vpop.f32.mrb[0].mxu0
        %v758 = vadd.f32 %v635, %v757
        %v759 = vpop.f32.mrb[0].mxu0
        %760 = vmatprep.mubr.f32.mxu0 0.0
        %761 = vmatmul.mubr.f32.gmra.mrb[0].mxu0 %v657
        %v762 = vpop.f32.mrb[0].mxu0
        %v763 = vadd.f32 %v635, %v762
        %v764 = vpop.f32.mrb[0].mxu0
        %765 = vmatprep.mubr.f32.mxu0 0.0
        %766 = vmatmul.mubr.f32.gmra.mrb[0].mxu0 %v660
        %v767 = vpop.f32.mrb[0].mxu0
        %v768 = vadd.f32 %v635, %v767
        %v769 = vpop.f32.mrb[0].mxu0
        %770 = vdwg.mxu0
        %771 = vst [vmem:[%s190] sm:$0xff] %v733
        %772 = vst [vmem:[%s190 + $0x8] sm:$0xff] %v738
        %773 = vst [vmem:[%s190 + $0x10] sm:$0xff] %v743
        %774 = vst [vmem:[%s190 + $0x18] sm:$0xff] %v748
        %775 = vst [vmem:[%s190 + $0x20] sm:$0xff] %v753
        %776 = vst [vmem:[%s190 + $0x28] sm:$0xff] %v758
        %777 = vst [vmem:[%s190 + $0x30] sm:$0xff] %v763
        %778 = vst [vmem:[%s190 + $0x38] sm:$0xff] %v768
        %s779 = sand.u32 %s109, 1
        %s780 = scalar_lea.sflag [#allocation4], %s779
        %s781 = sand.u32 %s109, 1
        %s782 = smul.addr %s781, 64
        %s783 = scalar_lea.vmem [#allocation3], %s782
        // Predicated region
        $region33: #{tpu_custom_call.1} parent=31 // pred_check
          %p784 = pneg %p119
        $region34: #{tpu_custom_call.1} parent=31 // pred_check_branch
          %786 = sbr.rel (%p784) target = $region36
        $region35: #{tpu_custom_call.1} parent=31 // pred_region
          %s787 = smul.u32 8, %s22
          %s789 = ssub.s32 1024, 1024
          %790 = vsyncadd %s780, %s789
          %s791 = smul.addr %s21, 8
          %s792 = sadd.s32 %s787, %s791
          %s793 = smul.addr %s792, 128
          %s794 = scalar_lea.hbm %s3, %s793
          %s795 = sshll.u32 %s783, 4
          %s796 = int_to_ptr.vmem [resolvable:$true] %s795
          %801 = dma.vmem_to_hbm [thread:$0]  %s796, 1024, %s794, %s780, 128, 128, 8
        $region36: #{tpu_custom_call.1} parent=31 // pred_fallthru
          _
      $region32: #{tpu_custom_call.1} parent=5 // pred_fallthru
        _
      %p802 = scmp.le.s32.totalorder 2, %s12
      // Predicated region
      $region37: #{tpu_custom_call.1} parent=5 // pred_check
        %p803 = pneg %p802
      $region38: #{tpu_custom_call.1} parent=5 // pred_check_branch
        %805 = sbr.rel (%p803) target = $region40
      $region39: #{tpu_custom_call.1} parent=5 // pred_region
        %s806 = ssub.s32 %s12, 2
        // Predicated region
        $region41: #{tpu_custom_call.1} parent=39 // pred_check
          %p807 = pneg %p125
        $region42: #{tpu_custom_call.1} parent=39 // pred_check_branch
          %809 = sbr.rel (%p807) target = $region44
        $region43: #{tpu_custom_call.1} parent=39 // pred_region
          %s810 = sand.u32 %s110, 1
          %s811 = scalar_lea.sflag [#allocation4], %s810
          %s812 = sand.u32 %s110, 1
          %s813 = smul.addr %s812, 64
          %s814 = scalar_lea.vmem [#allocation3], %s813
          %815 = dma.done %s811, 1024
        $region44: #{tpu_custom_call.1} parent=39 // pred_fallthru
          _
      $region40: #{tpu_custom_call.1} parent=5 // pred_fallthru
        _
    $region6: #{tpu_custom_call.1} parent=1 // loop_footer
      %s16 = sadd.s32 1, %s12
    $region7: #{tpu_custom_call.1} parent=1 // loop_footer_branch
      %11 = sbr.rel target = $region3
    $region8: #{tpu_custom_call.1} parent=1 // loop_exit
      _
    %816 = vsyncpa [#allocation4], 1
    %s817 = scalar_lea.sflag [#allocation4], 1
    %818 = vsyncpa %s817, 1

</llo_original>
